<compile_context>
chip_gen: v7x
topology: tpu7x:2x2x1
jax: 0.10.0
libtpu: 0.0.40
codegen_flags: <defaults>
</compile_context>

<pallas_src>
import jax
import jax.numpy as jnp
from jax.experimental import pallas as pl
from jax.experimental.pallas import tpu as pltpu


def _round_up(a, b):
    return (a + b - 1) // b * b


def _prefix_mlp_kernel(x_ref, w1_ref, b1_ref, w2_ref, b2_ref, o_ref, h_ref):
    # x_ref:  (tm, H)    bf16    w1_ref: (H, PH)     bf16 (single-buffered)
    # b1_ref: (1, PH)    f32     w2_ref: (1, PH, tn) bf16 (pre-tiled, contiguous)
    # b2_ref: (1, 1, tn) f32     o_ref:  (tm, tn)    bf16 (or f32)
    # h_ref:  (tm, PH)   bf16 VMEM scratch, recomputed whenever the M tile changes
    # (inner OUT-axis index resets to 0 whenever i -- or the core-split c --
    # advances, so the guard below fires exactly when a fresh h is needed).
    @pl.when(pl.program_id(2) == 0)
    def _():
        h = jnp.dot(x_ref[...], w1_ref[...],
                    preferred_element_type=jnp.float32)
        h_ref[...] = jnp.tanh(h + b1_ref[...]).astype(h_ref.dtype)

    o = jnp.dot(h_ref[...], w2_ref[0],
                preferred_element_type=jnp.float32) + b2_ref[0]
    o_ref[...] = o.astype(o_ref.dtype)


def prefix_mlp(x, w1, b1, w2, b2, *, tm=512, tn=512, core_split=2,
               vmem_limit_bytes=48 << 20, out_dtype=jnp.bfloat16):
    """x: (M, H) -> (M, OUT) computing (tanh(x@w1 + b1)) @ w2 + b2.

    Defaults target v7x (2 TCs, 64 MiB VMEM/TC, budgeted with headroom).
    On v6e/v5e (1 TC, 128 MiB VMEM) raise tn toward ~2048 and
    vmem_limit_bytes toward ~100-110 MiB for deeper DMA amortization.
    """
    M, H = x.shape
    PH = w1.shape[1]
    OUT = w2.shape[1]

    # M tile: cover the whole (padded) M whenever it fits, so w2 is streamed
    # from HBM exactly once.  Rounded to 16 (bf16 sublane packing).
    tm = _round_up(min(tm, _round_up(M, 16)), 16)
    M_pad = _round_up(M, tm)

    # OUT tile: lane-dense multiple of 128; pad OUT so it splits evenly across
    # core_split * tn blocks.
    tn = _round_up(min(tn, _round_up(OUT, 128)), 128)
    OUT_pad = _round_up(OUT, core_split * tn)
    nblk = OUT_pad // tn
    j_per_core = nblk // core_split

    # bf16 MXU inputs; f32 biases / accumulation.
    x_b = x.astype(jnp.bfloat16)
    w1_b = w1.astype(jnp.bfloat16)
    b1_2d = b1.reshape(1, PH).astype(jnp.float32)

    w2_b = w2.astype(jnp.bfloat16)
    b2_f = b2.astype(jnp.float32)
    if OUT_pad != OUT:
        w2_b = jnp.pad(w2_b, ((0, 0), (0, OUT_pad - OUT)))
        b2_f = jnp.pad(b2_f, ((0, OUT_pad - OUT),))
    # Pre-tile w2/b2 into block-contiguous layouts: each streamed block is one
    # large linear DMA instead of PH strided slivers.
    w2_t = jnp.transpose(w2_b.reshape(PH, nblk, tn), (1, 0, 2))   # (nblk, PH, tn)
    b2_t = b2_f.reshape(nblk, 1, tn)                              # (nblk, 1, tn)

    if M_pad != M:
        x_b = jnp.pad(x_b, ((0, M_pad - M), (0, 0)))

    grid = (core_split, M_pad // tm, j_per_core)

    out_bytes = jnp.dtype(out_dtype).itemsize
    cost = pl.CostEstimate(
        flops=2 * M_pad * (H * PH + PH * OUT_pad),
        transcendentals=M_pad * PH,
        bytes_accessed=(M_pad * H * 2            # x (bf16)
                        + H * PH * 2 + PH * 4    # w1 + b1
                        + PH * OUT_pad * 2       # w2 (dominant)
                        + OUT_pad * 4            # b2
                        + M_pad * OUT_pad * out_bytes),  # output
    )

    out = pl.pallas_call(
        _prefix_mlp_kernel,
        out_shape=jax.ShapeDtypeStruct((M_pad, OUT_pad), out_dtype),
        grid_spec=pltpu.PrefetchScalarGridSpec(
            num_scalar_prefetch=0,
            grid=grid,
            in_specs=[
                # x tile: depends only on the M-tile index.
                pl.BlockSpec((tm, H), lambda c, i, j: (i, 0)),
                # w1/b1 resident, fetched once -> single-buffer to save VMEM.
                pl.BlockSpec((H, PH), lambda c, i, j: (0, 0),
                             pipeline_mode=pl.Buffered(1)),
                pl.BlockSpec((1, PH), lambda c, i, j: (0, 0),
                             pipeline_mode=pl.Buffered(1)),
                # w2/b2 streamed per OUT block, block-contiguous layout.
                pl.BlockSpec((1, PH, tn),
                             lambda c, i, j: (c * j_per_core + j, 0, 0)),
                pl.BlockSpec((1, 1, tn),
                             lambda c, i, j: (c * j_per_core + j, 0, 0)),
            ],
            out_specs=pl.BlockSpec(
                (tm, tn), lambda c, i, j: (i, c * j_per_core + j)),
            scratch_shapes=[pltpu.VMEM((tm, PH), jnp.bfloat16)],
        ),
        compiler_params=pltpu.CompilerParams(
            dimension_semantics=("parallel", "arbitrary", "arbitrary"),
            vmem_limit_bytes=vmem_limit_bytes,
        ),
        cost_estimate=cost,
    )(x_b, w1_b, b1_2d, w2_t, b2_t)

    if M_pad != M or OUT_pad != OUT:
        out = out[:M, :OUT]
    return out


class PrefixEncoderPallas:
    """JAX/Pallas equivalent of the PyTorch PrefixEncoder."""

    def __init__(self, *, pre_seq_len, hidden_size, prefix_hidden_size,
                 num_hidden_layers, prefix_projection=True, key=None):
        self.prefix_projection = prefix_projection
        out_dim = num_hidden_layers * 2 * hidden_size
        key = key if key is not None else jax.random.PRNGKey(0)
        k_emb, k_w1, k_b1, k_w2, k_b2 = jax.random.split(key, 5)

        if prefix_projection:
            # Embedding(pre_seq_len, hidden_size) -- stored bf16 (MXU input).
            self.embedding = jax.random.normal(
                k_emb, (pre_seq_len, hidden_size), jnp.float32
            ).astype(jnp.bfloat16)
            # Linear(hidden_size, prefix_hidden_size): stored [in, out], bf16.
            self.w1 = (jax.random.normal(
                k_w1, (hidden_size, prefix_hidden_size), jnp.float32) * 0.02
            ).astype(jnp.bfloat16)
            self.b1 = jax.random.normal(
                k_b1, (prefix_hidden_size,), jnp.float32) * 0.02
            # Linear(prefix_hidden_size, num_layers*2*hidden): [in, out], bf16.
            self.w2 = (jax.random.normal(
                k_w2, (prefix_hidden_size, out_dim), jnp.float32) * 0.02
            ).astype(jnp.bfloat16)
            self.b2 = jax.random.normal(k_b2, (out_dim,), jnp.float32) * 0.02
        else:
            # Embedding(pre_seq_len, num_layers*2*hidden); forward is a pure
            # gather with no matmul hot path, so it stays in plain JAX.
            self.embedding = jax.random.normal(
                k_emb, (pre_seq_len, out_dim), jnp.float32)

    def __call__(self, prefix):
        # prefix: (B, P) int32 indices into the embedding table.
        B, P = prefix.shape
        if self.prefix_projection:
            prefix_tokens = jnp.take(self.embedding, prefix.reshape(-1),
                                     axis=0)                       # (B*P, H)
            out = prefix_mlp(prefix_tokens, self.w1, self.b1,
                             self.w2, self.b2)                     # (B*P, OUT)
            return out.reshape(B, P, -1)
        else:
            return jnp.take(self.embedding, prefix, axis=0)


def _reference(enc, prefix):
    """Pure-JAX reference of the projection path (same bf16/f32 recipe)."""
    B, P = prefix.shape
    t = jnp.take(enc.embedding, prefix.reshape(-1), axis=0)         # bf16
    h = jnp.tanh(jnp.dot(t, enc.w1,
                         preferred_element_type=jnp.float32) + enc.b1)
    o = jnp.dot(h.astype(jnp.bfloat16), enc.w2,
                preferred_element_type=jnp.float32) + enc.b2
    return o.reshape(B, P, -1)


if __name__ == "__main__":
    # Small config consistent with the module's forward.  Chosen so the kernel
    # exercises M-row padding (M=60 -> 64, single M tile), OUT padding
    # (768 -> 1024), and the 2-way core split (2 blocks of tn=512, one per c).
    pre_seq_len = 16
    hidden_size = 128
    prefix_hidden_size = 128
    num_hidden_layers = 3       # output dim = 3 * 2 * 128 = 768
    batch = 3
    prefix_len = 20             # B * P = 60 rows

    key = jax.random.PRNGKey(0)
    k_params, k_prefix = jax.random.split(key)

    enc = PrefixEncoderPallas(
        pre_seq_len=pre_seq_len,
        hidden_size=hidden_size,
        prefix_hidden_size=prefix_hidden_size,
        num_hidden_layers=num_hidden_layers,
        prefix_projection=True,
        key=k_params,
    )

    prefix = jax.random.randint(
        k_prefix, (batch, prefix_len), 0, pre_seq_len, dtype=jnp.int32)

    out = enc(prefix)
    out = jax.block_until_ready(out)

    expected_shape = (batch, prefix_len, num_hidden_layers * 2 * hidden_size)
    assert out.shape == expected_shape, (out.shape, expected_shape)
    assert out.dtype == jnp.bfloat16, out.dtype

    ref = _reference(enc, prefix)
    assert jnp.allclose(out.astype(jnp.float32), ref, atol=2e-2, rtol=2e-2), \
        "mismatch vs reference"

    # Smoke-test the non-projection (pure embedding) path as well.
    enc_np = PrefixEncoderPallas(
        pre_seq_len=pre_seq_len,
        hidden_size=hidden_size,
        prefix_hidden_size=prefix_hidden_size,
        num_hidden_layers=num_hidden_layers,
        prefix_projection=False,
        key=k_params,
    )
    out_np = jax.block_until_ready(enc_np(prefix))
    assert out_np.shape == expected_shape

    print("KERNEL_OK")
</pallas_src>

<mosaic_0001>
module attributes {stable_mosaic.version = 11 : i64} {
  func.func @_prefix_mlp_kernel(%arg0: i32, %arg1: i32, %arg2: i32, %arg3: memref<64x128xbf16, #tpu.memory_space<vmem>>, %arg4: memref<128x128xbf16, #tpu.memory_space<vmem>>, %arg5: memref<1x128xf32, #tpu.memory_space<vmem>>, %arg6: memref<1x128x512xbf16, #tpu.memory_space<vmem>>, %arg7: memref<1x1x512xf32, #tpu.memory_space<vmem>>, %arg8: memref<64x512xbf16, #tpu.memory_space<vmem>>, %arg9: memref<64x128xbf16, #tpu.memory_space<vmem>>) attributes {dimension_semantics = [#tpu.dimension_semantics<parallel>, #tpu.dimension_semantics<arbitrary>, #tpu.dimension_semantics<arbitrary>], iteration_bounds = array<i64: 2, 1, 1>, scalar_prefetch = 0 : i64, scratch_operands = 1 : i64, tpu.core_type = #tpu.core_type<tc>, window_params = [{transform_indices = @transform_0, window_bounds = array<i64: 64, 128>}, {pipeline_mode = #tpu.pipeline_mode<synchronous>, transform_indices = @transform_1, window_bounds = array<i64: 128, 128>}, {pipeline_mode = #tpu.pipeline_mode<synchronous>, transform_indices = @transform_2, window_bounds = array<i64: 1, 128>}, {transform_indices = @transform_3, window_bounds = array<i64: 1, 128, 512>}, {transform_indices = @transform_4, window_bounds = array<i64: 1, 1, 512>}, {transform_indices = @transform_5, window_bounds = array<i64: 64, 512>}]} {
    %c0_i32 = arith.constant 0 : i32
    %0 = arith.cmpi eq, %arg2, %c0_i32 : i32
    %1 = arith.extui %0 : i1 to i32
    %c0_i32_0 = arith.constant 0 : i32
    %2 = arith.cmpi ne, %1, %c0_i32_0 : i32
    scf.if %2 {
      %c0_10 = arith.constant 0 : index
      %c0_11 = arith.constant 0 : index
      %13 = vector.load %arg3[%c0_10, %c0_11] : memref<64x128xbf16, #tpu.memory_space<vmem>>, vector<64x128xbf16>
      %c0_12 = arith.constant 0 : index
      %c0_13 = arith.constant 0 : index
      %14 = vector.load %arg4[%c0_12, %c0_13] : memref<128x128xbf16, #tpu.memory_space<vmem>>, vector<128x128xbf16>
      %cst_14 = arith.constant dense<0.000000e+00> : vector<64x128xf32>
      %15 = tpu.matmul %13, %14, %cst_14 {dimension_numbers = #tpu.dot_dimension_numbers<[1], [0], [0], [1], [0, 0, 1, 1], [], []>} : vector<64x128xbf16>, vector<128x128xbf16>, vector<64x128xf32> -> vector<64x128xf32>
      %c0_15 = arith.constant 0 : index
      %c0_16 = arith.constant 0 : index
      %16 = vector.load %arg5[%c0_15, %c0_16] : memref<1x128xf32, #tpu.memory_space<vmem>>, vector<1x128xf32>
      %17 = vector.broadcast %16 : vector<1x128xf32> to vector<64x128xf32>
      %18 = arith.addf %15, %17 : vector<64x128xf32>
      %19 = math.tanh %18 : vector<64x128xf32>
      %20 = arith.truncf %19 : vector<64x128xf32> to vector<64x128xbf16>
      %c0_17 = arith.constant 0 : index
      %c0_18 = arith.constant 0 : index
      %21 = vector.load %arg9[%c0_17, %c0_18] : memref<64x128xbf16, #tpu.memory_space<vmem>>, vector<64x128xbf16>
      tpu.vector_store %arg9[%c0_17, %c0_18], %20 {strides = array<i32>} : memref<64x128xbf16, #tpu.memory_space<vmem>>, vector<64x128xbf16>,
    } else {
    }
    %c0 = arith.constant 0 : index
    %c0_1 = arith.constant 0 : index
    %3 = vector.load %arg9[%c0, %c0_1] : memref<64x128xbf16, #tpu.memory_space<vmem>>, vector<64x128xbf16>
    %c0_2 = arith.constant 0 : index
    %c0_3 = arith.constant 0 : index
    %c0_4 = arith.constant 0 : index
    %4 = vector.load %arg6[%c0_2, %c0_3, %c0_4] : memref<1x128x512xbf16, #tpu.memory_space<vmem>>, vector<1x128x512xbf16>
    %5 = vector.shape_cast %4 : vector<1x128x512xbf16> to vector<128x512xbf16>
    %cst = arith.constant dense<0.000000e+00> : vector<64x512xf32>
    %6 = tpu.matmul %3, %5, %cst {dimension_numbers = #tpu.dot_dimension_numbers<[1], [0], [0], [1], [0, 0, 1, 1], [], []>} : vector<64x128xbf16>, vector<128x512xbf16>, vector<64x512xf32> -> vector<64x512xf32>
    %c0_5 = arith.constant 0 : index
    %c0_6 = arith.constant 0 : index
    %c0_7 = arith.constant 0 : index
    %7 = vector.load %arg7[%c0_5, %c0_6, %c0_7] : memref<1x1x512xf32, #tpu.memory_space<vmem>>, vector<1x1x512xf32>
    %8 = vector.shape_cast %7 : vector<1x1x512xf32> to vector<1x512xf32>
    %9 = vector.broadcast %8 : vector<1x512xf32> to vector<64x512xf32>
    %10 = arith.addf %6, %9 : vector<64x512xf32>
    %11 = arith.truncf %10 : vector<64x512xf32> to vector<64x512xbf16>
    %c0_8 = arith.constant 0 : index
    %c0_9 = arith.constant 0 : index
    %12 = vector.load %arg8[%c0_8, %c0_9] : memref<64x512xbf16, #tpu.memory_space<vmem>>, vector<64x512xbf16>
    tpu.vector_store %arg8[%c0_8, %c0_9], %11 {strides = array<i32>} : memref<64x512xbf16, #tpu.memory_space<vmem>>, vector<64x512xbf16>,
    return
  }
  func.func @transform_0(%arg0: i32, %arg1: i32, %arg2: i32) -> (i32, i32) {
    %c0_i32 = arith.constant 0 : i32
    %c0_i32_0 = arith.constant 0 : i32
    return %arg1, %c0_i32 : i32, i32
  }
  func.func @transform_1(%arg0: i32, %arg1: i32, %arg2: i32) -> (i32, i32) {
    %c0_i32 = arith.constant 0 : i32
    %c0_i32_0 = arith.constant 0 : i32
    %c0_i32_1 = arith.constant 0 : i32
    return %c0_i32, %c0_i32_0 : i32, i32
  }
  func.func @transform_2(%arg0: i32, %arg1: i32, %arg2: i32) -> (i32, i32) {
    %c0_i32 = arith.constant 0 : i32
    %c0_i32_0 = arith.constant 0 : i32
    %c0_i32_1 = arith.constant 0 : i32
    return %c0_i32, %c0_i32_0 : i32, i32
  }
  func.func @transform_3(%arg0: i32, %arg1: i32, %arg2: i32) -> (i32, i32, i32) {
    %c1_i32 = arith.constant 1 : i32
    %0 = arith.muli %arg0, %c1_i32 : i32
    %1 = arith.addi %0, %arg2 : i32
    %c0_i32 = arith.constant 0 : i32
    %c0_i32_0 = arith.constant 0 : i32
    %c0_i32_1 = arith.constant 0 : i32
    return %1, %c0_i32, %c0_i32_0 : i32, i32, i32
  }
  func.func @transform_4(%arg0: i32, %arg1: i32, %arg2: i32) -> (i32, i32, i32) {
    %c1_i32 = arith.constant 1 : i32
    %0 = arith.muli %arg0, %c1_i32 : i32
    %1 = arith.addi %0, %arg2 : i32
    %c0_i32 = arith.constant 0 : i32
    %c0_i32_0 = arith.constant 0 : i32
    %c0_i32_1 = arith.constant 0 : i32
    return %1, %c0_i32, %c0_i32_0 : i32, i32, i32
  }
  func.func @transform_5(%arg0: i32, %arg1: i32, %arg2: i32) -> (i32, i32) {
    %c1_i32 = arith.constant 1 : i32
    %0 = arith.muli %arg0, %c1_i32 : i32
    %1 = arith.addi %0, %arg2 : i32
    %c0_i32 = arith.constant 0 : i32
    return %arg1, %1 : i32, i32
  }
}

</mosaic_0001>

<llo_original>
// kernel: tpu_custom_call.1
$region0: #{tpu_custom_call.1}
  #allocation0 [shape = 'u32[]', space=smem, size = 0x4, offset = 0x4, fixed_abs, tag = 'smem constant byte address 0x4 - core index']
  #allocation1 [shape = 'u32[144,128]{1,0:T(1,128)}', space=vmem, size = 0x12000, scoped, tag = 'internal scratch']
  #allocation2 [shape = 'bf16[64,128]{1,0:T(16,128)(2,1)}', space=vmem, size = 0x4000, scoped, tag = 'scratch operand']
  %s0 = inlined_call_operand.hbm [shape: bf16[64,128], index: 0, kind: input, shape index: {}]
  %s1 = inlined_call_operand.hbm [shape: bf16[128,128], index: 1, kind: input, shape index: {}]
  %s2 = inlined_call_operand.vmem [shape: f32[1,128], index: 2, kind: input, shape index: {}]
  %s3 = inlined_call_operand.hbm [shape: bf16[2,128,512], index: 3, kind: input, shape index: {}]
  %s4 = inlined_call_operand.vmem [shape: f32[2,1,512], index: 4, kind: input, shape index: {}]
  %s5 = inlined_call_operand.hbm [shape: bf16[64,1024], index: 5, kind: output, shape index: {}]
  %s6 = sld [smem:[#allocation0]]
  $region69: #{tpu_custom_call.1} parent=0
    _
  %s8 = ssub.s32 1, %s6
  %s9 = scalar_select 0, %s8, %s6
  $region1: #{tpu_custom_call.1} parent=0
    #allocation3 [shape = 'u8[16384]{0}', space=vmem, size = 0x4000, scoped, tag = 'input window, operand 0, single buffered']
    #allocation4 [shape = 's32[2]{0}', space=sflag, size = 0x8, scoped, tag = 'scoped memory for tpu_custom_call.1']
    #allocation5 [shape = 's32[2]{0}', space=sflag, size = 0x8, scoped, tag = 'scoped memory for tpu_custom_call.1']
    #allocation6 [shape = 'u8[32768]{0}', space=vmem, size = 0x8000, scoped, tag = 'input window, operand 1, single buffered']
    #allocation7 [shape = 's32[1]{0}', space=sflag, size = 0x4, scoped, tag = 'scoped memory for tpu_custom_call.1']
    #allocation8 [shape = 'u8[262144]{0}', space=vmem, size = 0x40000, scoped, tag = 'input window, operand 3']
    #allocation9 [shape = 'u8[131072]{0}', space=vmem, size = 0x20000, scoped, tag = 'output window, operand 0']
    %10 = vsyncpa [#allocation4], 0
    %11 = vsyncpa [#allocation7], 0
    %12 = vsyncpa [#allocation5], 0
    %s13 = scalar_lea.sflag [#allocation5], 1
    %14 = vsyncpa %s13, 0
    loop: start=0, step=1, limit=4
    $region2: #{tpu_custom_call.1} parent=1 // loop_pre_header
      _
    $region3: #{tpu_custom_call.1} parent=1 // loop_header
      %s16 = sphi 0, %s20
      %p17 = scmp.ge.s32.totalorder %s16, 4
      %s23 = sphi 0, %s42
      %s24 = sphi 0, %s38
      %s25 = sphi 0, %s34
      %s26 = sphi 0, %s23
      %s27 = sphi 0, %s24
      %s28 = sphi 0, %s25
      %s29 = sphi 0, %s26
      %s30 = sphi 0, %s27
      %s31 = sphi 0, %s28
      %s45 = sphi 0, %s47
      %s48 = sphi 0, %s45
      %s49 = sphi 0, %s48
      %s65 = sphi 0, %s49
      %s69 = sphi 0, %s69
      %s71 = sphi 0, %s69
      %s72 = sphi 0, %s71
      %s86 = sphi 0, %s72
      %s90 = sphi 0, %s90
      %s92 = sphi 0, %s90
      %s93 = sphi 0, %s92
      %s107 = sphi 0, %s93
      %s115 = sphi 0, %s117
      %s118 = sphi 0, %s115
      %s119 = sphi 0, %s118
      %s135 = sphi 0, %s119
      %s143 = sphi 0, %s145
      %s146 = sphi 0, %s143
      %s147 = sphi 0, %s146
      %s163 = sphi 0, %s147
      %s173 = sphi 0, %s175
      %s176 = sphi 0, %s173
      %s177 = sphi 0, %s176
      %s193 = sphi 0, %s177
    $region4: #{tpu_custom_call.1} parent=1 // loop_header_branch
      %19 = sbr.rel (%p17) target = $region8
    $region5: #{tpu_custom_call.1} parent=1 // loop_body
      %s21 = ssub.s32 %s16, 1
      %s22 = ssub.s32 %s16, 2
      %s32 = sadd.s32 1, %s25
      %p33 = scmp.ge.s32.totalorder %s32, 1
      %s34 = scalar_select %p33, 0, %s32
      %s35 = sadd.s32 1, %s24
      %s36 = scalar_select %p33, %s35, %s24
      %p37 = scmp.ge.s32.totalorder %s36, 1
      %s38 = scalar_select %p37, 0, %s36
      %s39 = sadd.s32 1, %s23
      %s40 = scalar_select %p37, %s39, %s23
      %p41 = scmp.ge.s32.totalorder %s40, 2
      %s42 = scalar_select %p41, 0, %s40
      %s43 = ssub.s32 %s24, %s38
      %p44 = scmp.eq.s32.totalorder %s43, 0
      %s46 = sadd.s32 %s45, 1
      %s47 = scalar_select %p44, %s45, %s46
      %p50 = pneg %p44
      %p51 = scmp.eq.s32.totalorder %s16, 1
      %p52 = por %p50, %p51
      %p53 = scmp.ne.s32.totalorder %s45, %s48
      %p54 = scmp.eq.s32.totalorder %s16, 0
      %p55 = por %p53, %p54
      %p56 = scmp.ne.s32.totalorder %s45, %s48
      %p57 = scmp.eq.s32.totalorder %s21, 1
      %p58 = por %p56, %p57
      %p59 = scmp.ne.s32.totalorder %s48, %s49
      %p60 = scmp.eq.s32.totalorder %s21, 0
      %p61 = por %p59, %p60
      %p62 = scmp.ne.s32.totalorder %s48, %s49
      %p63 = scmp.eq.s32.totalorder %s22, 1
      %p64 = por %p62, %p63
      %p66 = scmp.ne.s32.totalorder %s49, %s65
      %p67 = scmp.eq.s32.totalorder %s22, 0
      %p68 = por %p66, %p67
      %s70 = sadd.s32 %s69, 1
      %p73 = scmp.eq.s32.totalorder %s16, 1
      %p74 = scmp.ne.s32.totalorder %s69, %s71
      %p75 = scmp.eq.s32.totalorder %s16, 0
      %p76 = por %p74, %p75
      %p77 = scmp.ne.s32.totalorder %s69, %s71
      %p78 = scmp.eq.s32.totalorder %s21, 1
      %p79 = por %p77, %p78
      %p80 = scmp.ne.s32.totalorder %s71, %s72
      %p81 = scmp.eq.s32.totalorder %s21, 0
      %p82 = por %p80, %p81
      %p83 = scmp.ne.s32.totalorder %s71, %s72
      %p84 = scmp.eq.s32.totalorder %s22, 1
      %p85 = por %p83, %p84
      %p87 = scmp.ne.s32.totalorder %s72, %s86
      %p88 = scmp.eq.s32.totalorder %s22, 0
      %p89 = por %p87, %p88
      %s91 = sadd.s32 %s90, 1
      %p94 = scmp.eq.s32.totalorder %s16, 1
      %p95 = scmp.ne.s32.totalorder %s90, %s92
      %p96 = scmp.eq.s32.totalorder %s16, 0
      %p97 = por %p95, %p96
      %p98 = scmp.ne.s32.totalorder %s90, %s92
      %p99 = scmp.eq.s32.totalorder %s21, 1
      %p100 = por %p98, %p99
      %p101 = scmp.ne.s32.totalorder %s92, %s93
      %p102 = scmp.eq.s32.totalorder %s21, 0
      %p103 = por %p101, %p102
      %p104 = scmp.ne.s32.totalorder %s92, %s93
      %p105 = scmp.eq.s32.totalorder %s22, 1
      %p106 = por %p104, %p105
      %p108 = scmp.ne.s32.totalorder %s93, %s107
      %p109 = scmp.eq.s32.totalorder %s22, 0
      %p110 = por %p108, %p109
      %s111 = sadd.s32 %s23, %s25
      %s112 = sadd.s32 %s42, %s34
      %s113 = ssub.s32 %s111, %s112
      %p114 = scmp.eq.s32.totalorder %s113, 0
      %s116 = sadd.s32 %s115, 1
      %s117 = scalar_select %p114, %s115, %s116
      %p120 = pneg %p114
      %p121 = scmp.eq.s32.totalorder %s16, 1
      %p122 = por %p120, %p121
      %p123 = scmp.ne.s32.totalorder %s115, %s118
      %p124 = scmp.eq.s32.totalorder %s16, 0
      %p125 = por %p123, %p124
      %p126 = scmp.ne.s32.totalorder %s115, %s118
      %p127 = scmp.eq.s32.totalorder %s21, 1
      %p128 = por %p126, %p127
      %p129 = scmp.ne.s32.totalorder %s118, %s119
      %p130 = scmp.eq.s32.totalorder %s21, 0
      %p131 = por %p129, %p130
      %p132 = scmp.ne.s32.totalorder %s118, %s119
      %p133 = scmp.eq.s32.totalorder %s22, 1
      %p134 = por %p132, %p133
      %p136 = scmp.ne.s32.totalorder %s119, %s135
      %p137 = scmp.eq.s32.totalorder %s22, 0
      %p138 = por %p136, %p137
      %s139 = sadd.s32 %s23, %s25
      %s140 = sadd.s32 %s42, %s34
      %s141 = ssub.s32 %s139, %s140
      %p142 = scmp.eq.s32.totalorder %s141, 0
      %s144 = sadd.s32 %s143, 1
      %s145 = scalar_select %p142, %s143, %s144
      %p148 = pneg %p142
      %p149 = scmp.eq.s32.totalorder %s16, 1
      %p150 = por %p148, %p149
      %p151 = scmp.ne.s32.totalorder %s143, %s146
      %p152 = scmp.eq.s32.totalorder %s16, 0
      %p153 = por %p151, %p152
      %p154 = scmp.ne.s32.totalorder %s143, %s146
      %p155 = scmp.eq.s32.totalorder %s21, 1
      %p156 = por %p154, %p155
      %p157 = scmp.ne.s32.totalorder %s146, %s147
      %p158 = scmp.eq.s32.totalorder %s21, 0
      %p159 = por %p157, %p158
      %p160 = scmp.ne.s32.totalorder %s146, %s147
      %p161 = scmp.eq.s32.totalorder %s22, 1
      %p162 = por %p160, %p161
      %p164 = scmp.ne.s32.totalorder %s147, %s163
      %p165 = scmp.eq.s32.totalorder %s22, 0
      %p166 = por %p164, %p165
      %s167 = sadd.s32 %s23, %s25
      %s168 = sadd.s32 %s42, %s34
      %s169 = ssub.s32 %s24, %s38
      %s170 = ssub.s32 %s167, %s168
      %s171 = sor.u32 %s169, %s170
      %p172 = scmp.eq.s32.totalorder %s171, 0
      %s174 = sadd.s32 %s173, 1
      %s175 = scalar_select %p172, %s173, %s174
      %p178 = pneg %p172
      %p179 = scmp.eq.s32.totalorder %s16, 1
      %p180 = por %p178, %p179
      %p181 = scmp.ne.s32.totalorder %s173, %s176
      %p182 = scmp.eq.s32.totalorder %s16, 0
      %p183 = por %p181, %p182
      %p184 = scmp.ne.s32.totalorder %s173, %s176
      %p185 = scmp.eq.s32.totalorder %s21, 1
      %p186 = por %p184, %p185
      %p187 = scmp.ne.s32.totalorder %s176, %s177
      %p188 = scmp.eq.s32.totalorder %s21, 0
      %p189 = por %p187, %p188
      %p190 = scmp.ne.s32.totalorder %s176, %s177
      %p191 = scmp.eq.s32.totalorder %s22, 1
      %p192 = por %p190, %p191
      %p194 = scmp.ne.s32.totalorder %s177, %s193
      %p195 = scmp.eq.s32.totalorder %s22, 0
      %p196 = por %p194, %p195
      %p197 = scmp.le.s32.totalorder 1, %s16
      %p198 = scmp.lt.s32.totalorder %s16, 3
      %p199 = pnand %p197, %p198
      %p200 = pneg %p199
      // Predicated region
      $region9: #{tpu_custom_call.1} parent=5 // pred_check
        _
      $region10: #{tpu_custom_call.1} parent=5 // pred_check_branch
        %202 = sbr.rel (%p199) target = $region12
      $region11: #{tpu_custom_call.1} parent=5 // pred_region
        %s203 = ssub.s32 %s16, 1
        // Predicated region
        $region13: #{tpu_custom_call.1} parent=11 // pred_check
          %p204 = pneg %p61
        $region14: #{tpu_custom_call.1} parent=11 // pred_check_branch
          %206 = sbr.rel (%p204) target = $region16
        $region15: #{tpu_custom_call.1} parent=11 // pred_region
          %s207 = smul.u32 8, %s27
          %s209 = ssub.s32 512, 512
          %210 = vsyncadd [#allocation4], %s209
          %s211 = smul.addr %s207, 64
          %s212 = scalar_lea.hbm %s0, %s211
          %s213 = sshll.u32 [#allocation3], 4
          %s214 = int_to_ptr.vmem [resolvable:$true] %s213
          %219 = dma.hbm_to_vmem [thread:$0]  %s212, 512, %s214, [#allocation4], 64, 64, 4
        $region16: #{tpu_custom_call.1} parent=11 // pred_fallthru
          _
        // Predicated region
        $region17: #{tpu_custom_call.1} parent=11 // pred_check
          %p220 = pneg %p82
        $region18: #{tpu_custom_call.1} parent=11 // pred_check_branch
          %222 = sbr.rel (%p220) target = $region20
        $region19: #{tpu_custom_call.1} parent=11 // pred_region
          %s224 = ssub.s32 1024, 1024
          %225 = vsyncadd [#allocation7], %s224
          %s226 = sshll.u32 [#allocation6], 4
          %s227 = int_to_ptr.vmem [resolvable:$true] %s226
          %232 = dma.hbm_to_vmem [thread:$0]  %s1, 1024, %s227, [#allocation7], 64, 64, 4
        $region20: #{tpu_custom_call.1} parent=11 // pred_fallthru
          _
        // Predicated region
        $region21: #{tpu_custom_call.1} parent=11 // pred_check
          %p233 = pneg %p103
        $region22: #{tpu_custom_call.1} parent=11 // pred_check_branch
          %235 = sbr.rel (%p233) target = $region24
        $region23: #{tpu_custom_call.1} parent=11 // pred_region
          _
        $region24: #{tpu_custom_call.1} parent=11 // pred_fallthru
          _
      $region12: #{tpu_custom_call.1} parent=5 // pred_fallthru
        _
      %p236 = scmp.lt.s32.totalorder %s16, 2
      // Predicated region
      $region25: #{tpu_custom_call.1} parent=5 // pred_check
        %p237 = pneg %p236
      $region26: #{tpu_custom_call.1} parent=5 // pred_check_branch
        %239 = sbr.rel (%p237) target = $region28
      $region27: #{tpu_custom_call.1} parent=5 // pred_region
        // Predicated region
        $region29: #{tpu_custom_call.1} parent=27 // pred_check
          %p240 = pneg %p125
        $region30: #{tpu_custom_call.1} parent=27 // pred_check_branch
          %242 = sbr.rel (%p240) target = $region32
        $region31: #{tpu_custom_call.1} parent=27 // pred_region
          %s243 = sand.u32 %s16, 1
          %s244 = scalar_lea.sflag [#allocation4], %s243
          %s245 = sand.u32 %s115, 1
          %s246 = smul.addr %s245, 256
          %s247 = scalar_lea.vmem [#allocation8], %s246
          %s248 = sadd.s32 %s23, %s25
          %s250 = ssub.s32 4096, 4096
          %251 = vsyncadd %s244, %s250
          %s252 = smul.addr %s248, 64
          %s253 = smul.addr %s252, 64
          %s254 = scalar_lea.hbm %s3, %s253
          %s255 = sshll.u32 %s247, 4
          %s256 = int_to_ptr.vmem [resolvable:$true] %s255
          %261 = dma.hbm_to_vmem [thread:$0]  %s254, 4096, %s256, %s244, 256, 256, 16
        $region32: #{tpu_custom_call.1} parent=27 // pred_fallthru
          _
        // Predicated region
        $region33: #{tpu_custom_call.1} parent=27 // pred_check
          %p262 = pneg %p153
        $region34: #{tpu_custom_call.1} parent=27 // pred_check_branch
          %264 = sbr.rel (%p262) target = $region36
        $region35: #{tpu_custom_call.1} parent=27 // pred_region
          %s265 = sadd.s32 %s23, %s25
          %p266 = scmp.lt.s32.totalorder %s265, 1
          %s267 = scalar_select %p266, %s265, 1
          %s268 = smul.addr %s267, 4
          %s269 = scalar_lea.vmem %s4, %s268
          %s270 = sadd.s32 %s23, %s25
        $region36: #{tpu_custom_call.1} parent=27 // pred_fallthru
          _
      $region28: #{tpu_custom_call.1} parent=5 // pred_fallthru
        _
      %p271 = scmp.le.s32.totalorder 1, %s16
      %p272 = scmp.lt.s32.totalorder %s16, 3
      %p273 = pnand %p271, %p272
      %p274 = pneg %p273
      // Predicated region
      $region37: #{tpu_custom_call.1} parent=5 // pred_check
        _
      $region38: #{tpu_custom_call.1} parent=5 // pred_check_branch
        %276 = sbr.rel (%p273) target = $region40
      $region39: #{tpu_custom_call.1} parent=5 // pred_region
        %s277 = ssub.s32 %s16, 1
        // Predicated region
        $region41: #{tpu_custom_call.1} parent=39 // pred_check
          %p278 = pneg %p61
        $region42: #{tpu_custom_call.1} parent=39 // pred_check_branch
          %280 = sbr.rel (%p278) target = $region44
        $region43: #{tpu_custom_call.1} parent=39 // pred_region
          %281 = dma.done [#allocation4], 512
        $region44: #{tpu_custom_call.1} parent=39 // pred_fallthru
          _
        // Predicated region
        $region45: #{tpu_custom_call.1} parent=39 // pred_check
          %p282 = pneg %p82
        $region46: #{tpu_custom_call.1} parent=39 // pred_check_branch
          %284 = sbr.rel (%p282) target = $region48
        $region47: #{tpu_custom_call.1} parent=39 // pred_region
          %285 = dma.done [#allocation7], 1024
        $region48: #{tpu_custom_call.1} parent=39 // pred_fallthru
          _
        %s286 = sand.u32 %s21, 1
        %s287 = scalar_lea.sflag [#allocation4], %s286
        %s288 = sand.u32 %s118, 1
        %s289 = smul.addr %s288, 256
        %s290 = scalar_lea.vmem [#allocation8], %s289
        // Predicated region
        $region49: #{tpu_custom_call.1} parent=39 // pred_check
          %p291 = pneg %p131
        $region50: #{tpu_custom_call.1} parent=39 // pred_check_branch
          %293 = sbr.rel (%p291) target = $region52
        $region51: #{tpu_custom_call.1} parent=39 // pred_region
          %294 = dma.done %s287, 4096
        $region52: #{tpu_custom_call.1} parent=39 // pred_fallthru
          _
        %p295 = pneg %p61
        %p296 = pneg %p58
        %p297 = pneg %p82
        %p298 = pneg %p79
        %p299 = pneg %p103
        %p300 = pneg %p100
        %s301 = sand.u32 %s21, 1
        %s302 = scalar_lea.sflag [#allocation4], %s301
        %s303 = sand.u32 %s118, 1
        %s304 = smul.addr %s303, 256
        %s305 = scalar_lea.vmem [#allocation8], %s304
        %p306 = pneg %p131
        %p307 = pneg %p128
        %s308 = sadd.s32 %s26, %s28
        %p309 = scmp.lt.s32.totalorder %s308, 1
        %s310 = scalar_select %p309, %s308, 1
        %s311 = smul.addr %s310, 4
        %s312 = scalar_lea.vmem %s4, %s311
        %p313 = pneg %p159
        %p314 = pneg %p156
        %p315 = pneg %p189
        %p316 = pneg %p186
        %s317 = sand.u32 %s176, 1
        %s318 = scalar_lea.sflag [#allocation5], %s317
        %s319 = sand.u32 %s176, 1
        %s320 = smul.addr %s319, 128
        %s321 = scalar_lea.vmem [#allocation9], %s320
        %s322 = smul.u32 8, %s27
        %s323 = sadd.s32 %s26, %s28
        %s324 = sadd.s32 %s26, %s28
        %p325 = scmp.lt.s32.totalorder %s324, 1
        %s326 = scalar_select %p325, %s324, 1
        %s327 = smul.addr %s326, 4
        %s328 = scalar_lea.vmem %s4, %s327
        %s329 = sadd.s32 %s26, %s28
        %s330 = sadd.s32 %s26, %s28
        %s331 = smul.u32 8, %s27
        %s332 = smul.u32 4, %s330
        %p334 = scmp.eq.s32.totalorder %s28, 0
        // Predicated region
        $region53: #{tpu_custom_call.1} parent=39 // pred_check
          %p335 = pneg %p334
        $region54: #{tpu_custom_call.1} parent=39 // pred_check_branch
          %337 = sbr.rel (%p335) target = $region56
        $region55: #{tpu_custom_call.1} parent=39 // pred_region
          %v338 = vld [vmem:[#allocation3] sm:$0xf]
          %v339 = vld [vmem:[#allocation3 + $0x4] sm:$0xf]
          %v340 = vld [vmem:[#allocation3 + $0x8] sm:$0xf]
          %v341 = vld [vmem:[#allocation3 + $0xc] sm:$0xf]
          %v342 = vld [vmem:[#allocation3 + $0x10] sm:$0xf]
          %v343 = vld [vmem:[#allocation3 + $0x14] sm:$0xf]
          %v344 = vld [vmem:[#allocation3 + $0x18] sm:$0xf]
          %v345 = vld [vmem:[#allocation3 + $0x1c] sm:$0xf]
          %v346 = vld [vmem:[#allocation6] sm:$0xf]
          %v347 = vld [vmem:[#allocation6 + $0x4] sm:$0xf]
          %v348 = vld [vmem:[#allocation6 + $0x8] sm:$0xf]
          %v349 = vld [vmem:[#allocation6 + $0xc] sm:$0xf]
          %v350 = vld [vmem:[#allocation6 + $0x10] sm:$0xf]
          %v351 = vld [vmem:[#allocation6 + $0x14] sm:$0xf]
          %v352 = vld [vmem:[#allocation6 + $0x18] sm:$0xf]
          %v353 = vld [vmem:[#allocation6 + $0x1c] sm:$0xf]
          %v354 = vld [vmem:[#allocation6 + $0x20] sm:$0xf]
          %v355 = vld [vmem:[#allocation6 + $0x24] sm:$0xf]
          %v356 = vld [vmem:[#allocation6 + $0x28] sm:$0xf]
          %v357 = vld [vmem:[#allocation6 + $0x2c] sm:$0xf]
          %v358 = vld [vmem:[#allocation6 + $0x30] sm:$0xf]
          %v359 = vld [vmem:[#allocation6 + $0x34] sm:$0xf]
          %v360 = vld [vmem:[#allocation6 + $0x38] sm:$0xf]
          %v361 = vld [vmem:[#allocation6 + $0x3c] sm:$0xf]
          %v362 = vld [vmem:[%s2] sm:$0x1]
          %v364 = vlaneseq
          %v365 = vshrl.u32 %v364, 7
          %v366 = vsub.s32 0, %v365
          %v367 = vrot.slane %v362, %v366
          %v377 = vunpack.c.l.b16 %v338
          %v378 = vunpack.c.l.b16 %v339
          %v379 = vunpack.c.l.b16 %v340
          %v380 = vunpack.c.l.b16 %v341
          %v381 = vunpack.c.l.b16 %v342
          %v382 = vunpack.c.l.b16 %v343
          %v383 = vunpack.c.l.b16 %v344
          %v384 = vunpack.c.l.b16 %v345
          %v385 = vpack.c.b16 %v378, %v377
          %v386 = vpack.c.b16 %v380, %v379
          %v387 = vpack.c.b16 %v382, %v381
          %v388 = vpack.c.b16 %v384, %v383
          %v409 = vunpack.c.l.b16 %v346
          %v410 = vunpack.c.l.b16 %v347
          %v411 = vunpack.c.l.b16 %v348
          %v412 = vunpack.c.l.b16 %v349
          %v413 = vunpack.c.l.b16 %v350
          %v414 = vunpack.c.l.b16 %v351
          %v415 = vunpack.c.l.b16 %v352
          %v416 = vunpack.c.l.b16 %v353
          %v417 = vunpack.c.l.b16 %v354
          %v418 = vunpack.c.l.b16 %v355
          %v419 = vunpack.c.l.b16 %v356
          %v420 = vunpack.c.l.b16 %v357
          %v421 = vunpack.c.l.b16 %v358
          %v422 = vunpack.c.l.b16 %v359
          %v423 = vunpack.c.l.b16 %v360
          %v424 = vunpack.c.l.b16 %v361
          %v425 = vpack.c.b16 %v410, %v409
          %v426 = vpack.c.b16 %v412, %v411
          %v427 = vpack.c.b16 %v414, %v413
          %v428 = vpack.c.b16 %v416, %v415
          %v429 = vpack.c.b16 %v418, %v417
          %v430 = vpack.c.b16 %v420, %v419
          %v431 = vpack.c.b16 %v422, %v421
          %v432 = vpack.c.b16 %v424, %v423
          %441 = vmatprep.subr.bf16.mxu0 0
          %442 = vmatpush1.bf16.msra.mxu0 %v425
          %443 = vmatprep.subr.bf16.mxu0 0
          %444 = vmatpush1.bf16.msra.mxu0 %v426
          %445 = vmatprep.subr.bf16.mxu0 0
          %446 = vmatpush1.bf16.msra.mxu0 %v427
          %447 = vmatprep.subr.bf16.mxu0 0
          %448 = vmatpush1.bf16.msra.mxu0 %v428
          %449 = vmatprep.subr.bf16.mxu0 0
          %450 = vmatpush1.bf16.msra.mxu0 %v429
          %451 = vmatprep.subr.bf16.mxu0 0
          %452 = vmatpush1.bf16.msra.mxu0 %v430
          %453 = vmatprep.subr.bf16.mxu0 0
          %454 = vmatpush1.bf16.msra.mxu0 %v431
          %455 = vmatprep.subr.bf16.mxu0 0
          %456 = vmatpush1.bf16.msra.mxu0 %v432
          %457 = vmatprep.subr.bf16.mxu0 0
          %458 = vmatpush1.bf16.msra.mxu0 0
          %459 = vmatprep.subr.bf16.mxu0 0
          %460 = vmatpush1.bf16.msra.mxu0 0
          %461 = vmatprep.subr.bf16.mxu0 0
          %462 = vmatpush1.bf16.msra.mxu0 0
          %463 = vmatprep.subr.bf16.mxu0 0
          %464 = vmatpush1.bf16.msra.mxu0 0
          %465 = vmatprep.subr.bf16.mxu0 0
          %466 = vmatpush1.bf16.msra.mxu0 0
          %467 = vmatprep.subr.bf16.mxu0 0
          %468 = vmatpush1.bf16.msra.mxu0 0
          %469 = vmatprep.subr.bf16.mxu0 0
          %470 = vmatpush1.bf16.msra.mxu0 0
          %471 = vmatprep.subr.bf16.mxu0 0
          %472 = vmatpush1.bf16.msra.mxu0 0
          %473 = vmatprep.mubr.bf16.mxu0 0
          %474 = vmatmul.mubr.bf16.gmra.mrb[0].mxu0 %v385
          %v475 = vpop.f32.mrb[0].mxu0
          %v476 = vadd.f32 %v367, %v475
          %v477 = vpop.f32.mrb[0].mxu0
          %v478 = vpop.f32.mrb[0].mxu0
          %v479 = vadd.f32 %v367, %v478
          %v480 = vpop.f32.mrb[0].mxu0
          %481 = vmatprep.mubr.bf16.mxu0 0
          %482 = vmatmul.mubr.bf16.gmra.mrb[0].mxu0 %v386
          %v483 = vpop.f32.mrb[0].mxu0
          %v484 = vadd.f32 %v367, %v483
          %v485 = vpop.f32.mrb[0].mxu0
          %v486 = vpop.f32.mrb[0].mxu0
          %v487 = vadd.f32 %v367, %v486
          %v488 = vpop.f32.mrb[0].mxu0
          %489 = vmatprep.mubr.bf16.mxu0 0
          %490 = vmatmul.mubr.bf16.gmra.mrb[0].mxu0 %v387
          %v491 = vpop.f32.mrb[0].mxu0
          %v492 = vadd.f32 %v367, %v491
          %v493 = vpop.f32.mrb[0].mxu0
          %v494 = vpop.f32.mrb[0].mxu0
          %v495 = vadd.f32 %v367, %v494
          %v496 = vpop.f32.mrb[0].mxu0
          %497 = vmatprep.mubr.bf16.mxu0 0
          %498 = vmatmul.mubr.bf16.gmra.mrb[0].mxu0 %v388
          %v499 = vpop.f32.mrb[0].mxu0
          %v500 = vadd.f32 %v367, %v499
          %v501 = vpop.f32.mrb[0].mxu0
          %v502 = vpop.f32.mrb[0].mxu0
          %v503 = vadd.f32 %v367, %v502
          %v504 = vpop.f32.mrb[0].mxu0
          %505 = vdwg.mxu0
          %v506 = vtanh.pop %v476
          %v507 = vtanh.pop %v479
          %v508 = vtanh.pop %v484
          %v509 = vtanh.pop %v487
          %v510 = vtanh.pop %v492
          %v511 = vtanh.pop %v495
          %v512 = vtanh.pop %v500
          %v513 = vtanh.pop %v503
          %v514 = vpack.c.bf16 %v507, %v506
          %v515 = vpack.c.bf16 %v509, %v508
          %v516 = vpack.c.bf16 %v511, %v510
          %v517 = vpack.c.bf16 %v513, %v512
          %518 = vst [vmem:[#allocation2] sm:$0xff] %v514
          %519 = vst [vmem:[#allocation2 + $0x8] sm:$0xff] %v515
          %520 = vst [vmem:[#allocation2 + $0x10] sm:$0xff] %v516
          %521 = vst [vmem:[#allocation2 + $0x18] sm:$0xff] %v517
        $region56: #{tpu_custom_call.1} parent=39 // pred_fallthru
          _
        %v522 = vld [vmem:[#allocation2] sm:$0xff]
        %v523 = vld [vmem:[#allocation2 + $0x8] sm:$0xff]
        %v524 = vld [vmem:[#allocation2 + $0x10] sm:$0xff]
        %v525 = vld [vmem:[#allocation2 + $0x18] sm:$0xff]
        %v526 = vld [vmem:[%s290] sm:$0xff]
        %v527 = vld [vmem:[%s290 + $0x8] sm:$0xff]
        %v528 = vld [vmem:[%s290 + $0x10] sm:$0xff]
        %v529 = vld [vmem:[%s290 + $0x18] sm:$0xff]
        %v530 = vld [vmem:[%s290 + $0x20] sm:$0xff]
        %v531 = vld [vmem:[%s290 + $0x28] sm:$0xff]
        %v532 = vld [vmem:[%s290 + $0x30] sm:$0xff]
        %v533 = vld [vmem:[%s290 + $0x38] sm:$0xff]
        %v534 = vld [vmem:[%s290 + $0x40] sm:$0xff]
        %v535 = vld [vmem:[%s290 + $0x48] sm:$0xff]
        %v536 = vld [vmem:[%s290 + $0x50] sm:$0xff]
        %v537 = vld [vmem:[%s290 + $0x58] sm:$0xff]
        %v538 = vld [vmem:[%s290 + $0x60] sm:$0xff]
        %v539 = vld [vmem:[%s290 + $0x68] sm:$0xff]
        %v540 = vld [vmem:[%s290 + $0x70] sm:$0xff]
        %v541 = vld [vmem:[%s290 + $0x78] sm:$0xff]
        %v542 = vld [vmem:[%s290 + $0x80] sm:$0xff]
        %v543 = vld [vmem:[%s290 + $0x88] sm:$0xff]
        %v544 = vld [vmem:[%s290 + $0x90] sm:$0xff]
        %v545 = vld [vmem:[%s290 + $0x98] sm:$0xff]
        %v546 = vld [vmem:[%s290 + $0xa0] sm:$0xff]
        %v547 = vld [vmem:[%s290 + $0xa8] sm:$0xff]
        %v548 = vld [vmem:[%s290 + $0xb0] sm:$0xff]
        %v549 = vld [vmem:[%s290 + $0xb8] sm:$0xff]
        %v550 = vld [vmem:[%s290 + $0xc0] sm:$0xff]
        %v551 = vld [vmem:[%s290 + $0xc8] sm:$0xff]
        %v552 = vld [vmem:[%s290 + $0xd0] sm:$0xff]
        %v553 = vld [vmem:[%s290 + $0xd8] sm:$0xff]
        %v554 = vld [vmem:[%s290 + $0xe0] sm:$0xff]
        %v555 = vld [vmem:[%s290 + $0xe8] sm:$0xff]
        %v556 = vld [vmem:[%s290 + $0xf0] sm:$0xff]
        %v557 = vld [vmem:[%s290 + $0xf8] sm:$0xff]
        %v558 = vld [vmem:[%s328] sm:$0xf]
        %v560 = vlaneseq
        %v561 = vshrl.u32 %v560, 7
        %v562 = vsub.s32 0, %v561
        %v563 = vrot.slane %v558, %v562
        %v564 = vlaneseq
        %v565 = vshrl.u32 %v564, 7
        %v566 = vsub.s32 1, %v565
        %v567 = vrot.slane %v558, %v566
        %v568 = vlaneseq
        %v569 = vshrl.u32 %v568, 7
        %v570 = vsub.s32 2, %v569
        %v571 = vrot.slane %v558, %v570
        %v572 = vlaneseq
        %v573 = vshrl.u32 %v572, 7
        %v574 = vsub.s32 3, %v573
        %v575 = vrot.slane %v558, %v574
        %v612 = vunpack.c.l.b16 %v526
        %v613 = vunpack.c.h.b16 %v526
        %v614 = vunpack.c.l.b16 %v527
        %v615 = vunpack.c.h.b16 %v527
        %v616 = vunpack.c.l.b16 %v528
        %v617 = vunpack.c.h.b16 %v528
        %v618 = vunpack.c.l.b16 %v529
        %v619 = vunpack.c.h.b16 %v529
        %v620 = vunpack.c.l.b16 %v530
        %v621 = vunpack.c.h.b16 %v530
        %v622 = vunpack.c.l.b16 %v531
        %v623 = vunpack.c.h.b16 %v531
        %v624 = vunpack.c.l.b16 %v532
        %v625 = vunpack.c.h.b16 %v532
        %v626 = vunpack.c.l.b16 %v533
        %v627 = vunpack.c.h.b16 %v533
        %v628 = vunpack.c.l.b16 %v534
        %v629 = vunpack.c.h.b16 %v534
        %v630 = vunpack.c.l.b16 %v535
        %v631 = vunpack.c.h.b16 %v535
        %v632 = vunpack.c.l.b16 %v536
        %v633 = vunpack.c.h.b16 %v536
        %v634 = vunpack.c.l.b16 %v537
        %v635 = vunpack.c.h.b16 %v537
        %v636 = vunpack.c.l.b16 %v538
        %v637 = vunpack.c.h.b16 %v538
        %v638 = vunpack.c.l.b16 %v539
        %v639 = vunpack.c.h.b16 %v539
        %v640 = vunpack.c.l.b16 %v540
        %v641 = vunpack.c.h.b16 %v540
        %v642 = vunpack.c.l.b16 %v541
        %v643 = vunpack.c.h.b16 %v541
        %v644 = vunpack.c.l.b16 %v542
        %v645 = vunpack.c.h.b16 %v542
        %v646 = vunpack.c.l.b16 %v543
        %v647 = vunpack.c.h.b16 %v543
        %v648 = vunpack.c.l.b16 %v544
        %v649 = vunpack.c.h.b16 %v544
        %v650 = vunpack.c.l.b16 %v545
        %v651 = vunpack.c.h.b16 %v545
        %v652 = vunpack.c.l.b16 %v546
        %v653 = vunpack.c.h.b16 %v546
        %v654 = vunpack.c.l.b16 %v547
        %v655 = vunpack.c.h.b16 %v547
        %v656 = vunpack.c.l.b16 %v548
        %v657 = vunpack.c.h.b16 %v548
        %v658 = vunpack.c.l.b16 %v549
        %v659 = vunpack.c.h.b16 %v549
        %v660 = vunpack.c.l.b16 %v550
        %v661 = vunpack.c.h.b16 %v550
        %v662 = vunpack.c.l.b16 %v551
        %v663 = vunpack.c.h.b16 %v551
        %v664 = vunpack.c.l.b16 %v552
        %v665 = vunpack.c.h.b16 %v552
        %v666 = vunpack.c.l.b16 %v553
        %v667 = vunpack.c.h.b16 %v553
        %v668 = vunpack.c.l.b16 %v554
        %v669 = vunpack.c.h.b16 %v554
        %v670 = vunpack.c.l.b16 %v555
        %v671 = vunpack.c.h.b16 %v555
        %v672 = vunpack.c.l.b16 %v556
        %v673 = vunpack.c.h.b16 %v556
        %v674 = vunpack.c.l.b16 %v557
        %v675 = vunpack.c.h.b16 %v557
        %v676 = vpack.c.b16 %v616, %v612
        %v677 = vpack.c.b16 %v617, %v613
        %v678 = vpack.c.b16 %v618, %v614
        %v679 = vpack.c.b16 %v619, %v615
        %v680 = vpack.c.b16 %v624, %v620
        %v681 = vpack.c.b16 %v625, %v621
        %v682 = vpack.c.b16 %v626, %v622
        %v683 = vpack.c.b16 %v627, %v623
        %v684 = vpack.c.b16 %v632, %v628
        %v685 = vpack.c.b16 %v633, %v629
        %v686 = vpack.c.b16 %v634, %v630
        %v687 = vpack.c.b16 %v635, %v631
        %v688 = vpack.c.b16 %v640, %v636
        %v689 = vpack.c.b16 %v641, %v637
        %v690 = vpack.c.b16 %v642, %v638
        %v691 = vpack.c.b16 %v643, %v639
        %v692 = vpack.c.b16 %v648, %v644
        %v693 = vpack.c.b16 %v649, %v645
        %v694 = vpack.c.b16 %v650, %v646
        %v695 = vpack.c.b16 %v651, %v647
        %v696 = vpack.c.b16 %v656, %v652
        %v697 = vpack.c.b16 %v657, %v653
        %v698 = vpack.c.b16 %v658, %v654
        %v699 = vpack.c.b16 %v659, %v655
        %v700 = vpack.c.b16 %v664, %v660
        %v701 = vpack.c.b16 %v665, %v661
        %v702 = vpack.c.b16 %v666, %v662
        %v703 = vpack.c.b16 %v667, %v663
        %v704 = vpack.c.b16 %v672, %v668
        %v705 = vpack.c.b16 %v673, %v669
        %v706 = vpack.c.b16 %v674, %v670
        %v707 = vpack.c.b16 %v675, %v671
        %740 = vmatprep.subr.bf16.mxu0 %v677
        %741 = vmatpush1.bf16.msra.mxu0 %v676
        %742 = vmatprep.subr.bf16.mxu0 %v681
        %743 = vmatpush1.bf16.msra.mxu0 %v680
        %744 = vmatprep.subr.bf16.mxu0 %v685
        %745 = vmatpush1.bf16.msra.mxu0 %v684
        %746 = vmatprep.subr.bf16.mxu0 %v689
        %747 = vmatpush1.bf16.msra.mxu0 %v688
        %748 = vmatprep.subr.bf16.mxu0 %v693
        %749 = vmatpush1.bf16.msra.mxu0 %v692
        %750 = vmatprep.subr.bf16.mxu0 %v697
        %751 = vmatpush1.bf16.msra.mxu0 %v696
        %752 = vmatprep.subr.bf16.mxu0 %v701
        %753 = vmatpush1.bf16.msra.mxu0 %v700
        %754 = vmatprep.subr.bf16.mxu0 %v705
        %755 = vmatpush1.bf16.msra.mxu0 %v704
        %756 = vmatprep.subr.bf16.mxu0 0
        %757 = vmatpush1.bf16.msra.mxu0 0
        %758 = vmatprep.subr.bf16.mxu0 0
        %759 = vmatpush1.bf16.msra.mxu0 0
        %760 = vmatprep.subr.bf16.mxu0 0
        %761 = vmatpush1.bf16.msra.mxu0 0
        %762 = vmatprep.subr.bf16.mxu0 0
        %763 = vmatpush1.bf16.msra.mxu0 0
        %764 = vmatprep.subr.bf16.mxu0 0
        %765 = vmatpush1.bf16.msra.mxu0 0
        %766 = vmatprep.subr.bf16.mxu0 0
        %767 = vmatpush1.bf16.msra.mxu0 0
        %768 = vmatprep.subr.bf16.mxu0 0
        %769 = vmatpush1.bf16.msra.mxu0 0
        %770 = vmatprep.subr.bf16.mxu0 0
        %771 = vmatpush1.bf16.msra.mxu0 0
        %772 = vmatprep.mubr.bf16.mxu0 0
        %773 = vmatmul.mubr.bf16.gmra.mrb[0].mxu0 %v522
        %v774 = vpop.f32.mrb[0].mxu0
        %v775 = vadd.f32 %v563, %v774
        %v776 = vpop.f32.mrb[0].mxu0
        %v777 = vadd.f32 %v567, %v776
        %v778 = vpop.f32.mrb[0].mxu0
        %v779 = vadd.f32 %v563, %v778
        %v780 = vpop.f32.mrb[0].mxu0
        %v781 = vadd.f32 %v567, %v780
        %782 = vmatprep.mubr.bf16.mxu0 0
        %783 = vmatmul.mubr.bf16.gmra.mrb[0].mxu0 %v523
        %v784 = vpop.f32.mrb[0].mxu0
        %v785 = vadd.f32 %v563, %v784
        %v786 = vpop.f32.mrb[0].mxu0
        %v787 = vadd.f32 %v567, %v786
        %v788 = vpop.f32.mrb[0].mxu0
        %v789 = vadd.f32 %v563, %v788
        %v790 = vpop.f32.mrb[0].mxu0
        %v791 = vadd.f32 %v567, %v790
        %792 = vmatprep.mubr.bf16.mxu0 0
        %793 = vmatmul.mubr.bf16.gmra.mrb[0].mxu0 %v524
        %v794 = vpop.f32.mrb[0].mxu0
        %v795 = vadd.f32 %v563, %v794
        %v796 = vpop.f32.mrb[0].mxu0
        %v797 = vadd.f32 %v567, %v796
        %v798 = vpop.f32.mrb[0].mxu0
        %v799 = vadd.f32 %v563, %v798
        %v800 = vpop.f32.mrb[0].mxu0
        %v801 = vadd.f32 %v567, %v800
        %802 = vmatprep.mubr.bf16.mxu0 0
        %803 = vmatmul.mubr.bf16.gmra.mrb[0].mxu0 %v525
        %v804 = vpop.f32.mrb[0].mxu0
        %v805 = vadd.f32 %v563, %v804
        %v806 = vpop.f32.mrb[0].mxu0
        %v807 = vadd.f32 %v567, %v806
        %v808 = vpop.f32.mrb[0].mxu0
        %v809 = vadd.f32 %v563, %v808
        %v810 = vpop.f32.mrb[0].mxu0
        %v811 = vadd.f32 %v567, %v810
        %812 = vdwg.mxu0
        %813 = vmatprep.subr.bf16.mxu0 %v679
        %814 = vmatpush1.bf16.msra.mxu0 %v678
        %815 = vmatprep.subr.bf16.mxu0 %v683
        %816 = vmatpush1.bf16.msra.mxu0 %v682
        %817 = vmatprep.subr.bf16.mxu0 %v687
        %818 = vmatpush1.bf16.msra.mxu0 %v686
        %819 = vmatprep.subr.bf16.mxu0 %v691
        %820 = vmatpush1.bf16.msra.mxu0 %v690
        %821 = vmatprep.subr.bf16.mxu0 %v695
        %822 = vmatpush1.bf16.msra.mxu0 %v694
        %823 = vmatprep.subr.bf16.mxu0 %v699
        %824 = vmatpush1.bf16.msra.mxu0 %v698
        %825 = vmatprep.subr.bf16.mxu0 %v703
        %826 = vmatpush1.bf16.msra.mxu0 %v702
        %827 = vmatprep.subr.bf16.mxu0 %v707
        %828 = vmatpush1.bf16.msra.mxu0 %v706
        %829 = vmatprep.subr.bf16.mxu0 0
        %830 = vmatpush1.bf16.msra.mxu0 0
        %831 = vmatprep.subr.bf16.mxu0 0
        %832 = vmatpush1.bf16.msra.mxu0 0
        %833 = vmatprep.subr.bf16.mxu0 0
        %834 = vmatpush1.bf16.msra.mxu0 0
        %835 = vmatprep.subr.bf16.mxu0 0
        %836 = vmatpush1.bf16.msra.mxu0 0
        %837 = vmatprep.subr.bf16.mxu0 0
        %838 = vmatpush1.bf16.msra.mxu0 0
        %839 = vmatprep.subr.bf16.mxu0 0
        %840 = vmatpush1.bf16.msra.mxu0 0
        %841 = vmatprep.subr.bf16.mxu0 0
        %842 = vmatpush1.bf16.msra.mxu0 0
        %843 = vmatprep.subr.bf16.mxu0 0
        %844 = vmatpush1.bf16.msra.mxu0 0
        %845 = vmatprep.mubr.bf16.mxu0 0
        %846 = vmatmul.mubr.bf16.gmra.mrb[0].mxu0 %v522
        %v847 = vpop.f32.mrb[0].mxu0
        %v848 = vadd.f32 %v571, %v847
        %v849 = vpop.f32.mrb[0].mxu0
        %v850 = vadd.f32 %v575, %v849
        %v851 = vpop.f32.mrb[0].mxu0
        %v852 = vadd.f32 %v571, %v851
        %v853 = vpop.f32.mrb[0].mxu0
        %v854 = vadd.f32 %v575, %v853
        %855 = vmatprep.mubr.bf16.mxu0 0
        %856 = vmatmul.mubr.bf16.gmra.mrb[0].mxu0 %v523
        %v857 = vpop.f32.mrb[0].mxu0
        %v858 = vadd.f32 %v571, %v857
        %v859 = vpop.f32.mrb[0].mxu0
        %v860 = vadd.f32 %v575, %v859
        %v861 = vpop.f32.mrb[0].mxu0
        %v862 = vadd.f32 %v571, %v861
        %v863 = vpop.f32.mrb[0].mxu0
        %v864 = vadd.f32 %v575, %v863
        %865 = vmatprep.mubr.bf16.mxu0 0
        %866 = vmatmul.mubr.bf16.gmra.mrb[0].mxu0 %v524
        %v867 = vpop.f32.mrb[0].mxu0
        %v868 = vadd.f32 %v571, %v867
        %v869 = vpop.f32.mrb[0].mxu0
        %v870 = vadd.f32 %v575, %v869
        %v871 = vpop.f32.mrb[0].mxu0
        %v872 = vadd.f32 %v571, %v871
        %v873 = vpop.f32.mrb[0].mxu0
        %v874 = vadd.f32 %v575, %v873
        %875 = vmatprep.mubr.bf16.mxu0 0
        %876 = vmatmul.mubr.bf16.gmra.mrb[0].mxu0 %v525
        %v877 = vpop.f32.mrb[0].mxu0
        %v878 = vadd.f32 %v571, %v877
        %v879 = vpop.f32.mrb[0].mxu0
        %v880 = vadd.f32 %v575, %v879
        %v881 = vpop.f32.mrb[0].mxu0
        %v882 = vadd.f32 %v571, %v881
        %v883 = vpop.f32.mrb[0].mxu0
        %v884 = vadd.f32 %v575, %v883
        %885 = vdwg.mxu0
        %v886 = vpack.c.bf16 %v779, %v775
        %v887 = vpack.c.bf16 %v781, %v777
        %v888 = vpack.c.bf16 %v852, %v848
        %v889 = vpack.c.bf16 %v854, %v850
        %v890 = vpack.c.bf16 %v789, %v785
        %v891 = vpack.c.bf16 %v791, %v787
        %v892 = vpack.c.bf16 %v862, %v858
        %v893 = vpack.c.bf16 %v864, %v860
        %v894 = vpack.c.bf16 %v799, %v795
        %v895 = vpack.c.bf16 %v801, %v797
        %v896 = vpack.c.bf16 %v872, %v868
        %v897 = vpack.c.bf16 %v874, %v870
        %v898 = vpack.c.bf16 %v809, %v805
        %v899 = vpack.c.bf16 %v811, %v807
        %v900 = vpack.c.bf16 %v882, %v878
        %v901 = vpack.c.bf16 %v884, %v880
        %v918 = vunpack.c.l.b16 %v886
        %v919 = vunpack.c.l.b16 %v887
        %v920 = vunpack.c.l.b16 %v888
        %v921 = vunpack.c.l.b16 %v889
        %v922 = vunpack.c.h.b16 %v886
        %v923 = vunpack.c.h.b16 %v887
        %v924 = vunpack.c.h.b16 %v888
        %v925 = vunpack.c.h.b16 %v889
        %v926 = vunpack.c.l.b16 %v890
        %v927 = vunpack.c.l.b16 %v891
        %v928 = vunpack.c.l.b16 %v892
        %v929 = vunpack.c.l.b16 %v893
        %v930 = vunpack.c.h.b16 %v890
        %v931 = vunpack.c.h.b16 %v891
        %v932 = vunpack.c.h.b16 %v892
        %v933 = vunpack.c.h.b16 %v893
        %v934 = vunpack.c.l.b16 %v894
        %v935 = vunpack.c.l.b16 %v895
        %v936 = vunpack.c.l.b16 %v896
        %v937 = vunpack.c.l.b16 %v897
        %v938 = vunpack.c.h.b16 %v894
        %v939 = vunpack.c.h.b16 %v895
        %v940 = vunpack.c.h.b16 %v896
        %v941 = vunpack.c.h.b16 %v897
        %v942 = vunpack.c.l.b16 %v898
        %v943 = vunpack.c.l.b16 %v899
        %v944 = vunpack.c.l.b16 %v900
        %v945 = vunpack.c.l.b16 %v901
        %v946 = vunpack.c.h.b16 %v898
        %v947 = vunpack.c.h.b16 %v899
        %v948 = vunpack.c.h.b16 %v900
        %v949 = vunpack.c.h.b16 %v901
        %v950 = vpack.c.b16 %v919, %v918
        %v951 = vpack.c.b16 %v921, %v920
        %v952 = vpack.c.b16 %v923, %v922
        %v953 = vpack.c.b16 %v925, %v924
        %v954 = vpack.c.b16 %v927, %v926
        %v955 = vpack.c.b16 %v929, %v928
        %v956 = vpack.c.b16 %v931, %v930
        %v957 = vpack.c.b16 %v933, %v932
        %v958 = vpack.c.b16 %v935, %v934
        %v959 = vpack.c.b16 %v937, %v936
        %v960 = vpack.c.b16 %v939, %v938
        %v961 = vpack.c.b16 %v941, %v940
        %v962 = vpack.c.b16 %v943, %v942
        %v963 = vpack.c.b16 %v945, %v944
        %v964 = vpack.c.b16 %v947, %v946
        %v965 = vpack.c.b16 %v949, %v948
        %982 = vst [vmem:[%s321] sm:$0xff] %v950
        %983 = vst [vmem:[%s321 + $0x8] sm:$0xff] %v951
        %984 = vst [vmem:[%s321 + $0x10] sm:$0xff] %v952
        %985 = vst [vmem:[%s321 + $0x18] sm:$0xff] %v953
        %986 = vst [vmem:[%s321 + $0x20] sm:$0xff] %v954
        %987 = vst [vmem:[%s321 + $0x28] sm:$0xff] %v955
        %988 = vst [vmem:[%s321 + $0x30] sm:$0xff] %v956
        %989 = vst [vmem:[%s321 + $0x38] sm:$0xff] %v957
        %990 = vst [vmem:[%s321 + $0x40] sm:$0xff] %v958
        %991 = vst [vmem:[%s321 + $0x48] sm:$0xff] %v959
        %992 = vst [vmem:[%s321 + $0x50] sm:$0xff] %v960
        %993 = vst [vmem:[%s321 + $0x58] sm:$0xff] %v961
        %994 = vst [vmem:[%s321 + $0x60] sm:$0xff] %v962
        %995 = vst [vmem:[%s321 + $0x68] sm:$0xff] %v963
        %996 = vst [vmem:[%s321 + $0x70] sm:$0xff] %v964
        %997 = vst [vmem:[%s321 + $0x78] sm:$0xff] %v965
        %s998 = sand.u32 %s176, 1
        %s999 = scalar_lea.sflag [#allocation5], %s998
        %s1000 = sand.u32 %s176, 1
        %s1001 = smul.addr %s1000, 128
        %s1002 = scalar_lea.vmem [#allocation9], %s1001
        // Predicated region
        $region57: #{tpu_custom_call.1} parent=39 // pred_check
          %p1003 = pneg %p186
        $region58: #{tpu_custom_call.1} parent=39 // pred_check_branch
          %1005 = sbr.rel (%p1003) target = $region60
        $region59: #{tpu_custom_call.1} parent=39 // pred_region
          %s1006 = sadd.s32 %s26, %s28
          %s1007 = smul.u32 8, %s27
          %s1008 = smul.u32 4, %s1006
          %s1010 = ssub.s32 2048, 2048
          %1011 = vsyncadd %s999, %s1010
          %s1012 = smul.addr %s1007, 8
          %s1013 = sadd.s32 %s1008, %s1012
          %s1014 = smul.addr %s1013, 64
          %s1015 = scalar_lea.hbm %s5, %s1014
          %s1016 = sshll.u32 %s1002, 4
          %s1017 = int_to_ptr.vmem [resolvable:$true] %s1016
          %1022 = dma.vmem_to_hbm [thread:$0]  %s1017, 2048, %s1015, %s999, 256, 512, 16
        $region60: #{tpu_custom_call.1} parent=39 // pred_fallthru
          _
      $region40: #{tpu_custom_call.1} parent=5 // pred_fallthru
        _
      %p1023 = scmp.le.s32.totalorder 2, %s16
      // Predicated region
      $region61: #{tpu_custom_call.1} parent=5 // pred_check
        %p1024 = pneg %p1023
      $region62: #{tpu_custom_call.1} parent=5 // pred_check_branch
        %1026 = sbr.rel (%p1024) target = $region64
      $region63: #{tpu_custom_call.1} parent=5 // pred_region
        %s1027 = ssub.s32 %s16, 2
        // Predicated region
        $region65: #{tpu_custom_call.1} parent=63 // pred_check
          %p1028 = pneg %p192
        $region66: #{tpu_custom_call.1} parent=63 // pred_check_branch
          %1030 = sbr.rel (%p1028) target = $region68
        $region67: #{tpu_custom_call.1} parent=63 // pred_region
          %s1031 = sand.u32 %s177, 1
          %s1032 = scalar_lea.sflag [#allocation5], %s1031
          %s1033 = sand.u32 %s177, 1
          %s1034 = smul.addr %s1033, 128
          %s1035 = scalar_lea.vmem [#allocation9], %s1034
          %1036 = dma.done %s1032, 2048
        $region68: #{tpu_custom_call.1} parent=63 // pred_fallthru
          _
      $region64: #{tpu_custom_call.1} parent=5 // pred_fallthru
        _
    $region6: #{tpu_custom_call.1} parent=1 // loop_footer
      %s20 = sadd.s32 1, %s16
    $region7: #{tpu_custom_call.1} parent=1 // loop_footer_branch
      %15 = sbr.rel target = $region3
    $region8: #{tpu_custom_call.1} parent=1 // loop_exit
      _
    %1037 = vsyncpa [#allocation4], 1
    %s1038 = scalar_lea.sflag [#allocation4], 1
    %1039 = vsyncpa %s1038, 1
    %1040 = vsyncpa [#allocation7], 1
    %1041 = vsyncpa [#allocation5], 1
    %s1042 = scalar_lea.sflag [#allocation5], 1
    %1043 = vsyncpa %s1042, 1

</llo_original>
